<compile_context>
chip_gen: v7x
topology: tpu7x:2x2x1
jax: 0.10.0
libtpu: 0.0.40
codegen_flags: <defaults>
</compile_context>

<pallas_src>
import functools
import math

import jax
import jax.numpy as jnp
from jax.experimental import pallas as pl
from jax.experimental.pallas import tpu as pltpu

F32 = jnp.float32
LN_EPS = 1e-5  # nn.LayerNorm default


def _tile(n, target):
    """Largest divisor of n that is <= target (blocks always divide exactly)."""
    t = max(1, min(n, target))
    while n % t:
        t -= 1
    return t


def _full_spec(arr):
    """BlockSpec covering the whole (weight) array, constant over a 1-D grid."""
    ndim = arr.ndim
    return pl.BlockSpec(arr.shape, lambda i, _n=ndim: (0,) * _n)


_PARALLEL_1D = pltpu.CompilerParams(dimension_semantics=("parallel",))


# ------------------------------------------------ LayerNorm + Q/K/V (fused) --
def _ln_qkv_kernel(x_ref, nw_ref, nb_ref,
                   wq_ref, bq_ref, wk_ref, bk_ref, wv_ref, bv_ref,
                   q_ref, k_ref, v_ref, *, eps, q_scale):
    x = x_ref[...].astype(F32)
    mu = jnp.mean(x, axis=-1, keepdims=True)
    var = jnp.mean(jnp.square(x - mu), axis=-1, keepdims=True)
    xn = (x - mu) * jax.lax.rsqrt(var + eps) * nw_ref[...] + nb_ref[...]
    q = jnp.dot(xn, wq_ref[...], preferred_element_type=F32) + bq_ref[...]
    q_ref[...] = (q * q_scale).astype(q_ref.dtype)  # fold 1/sqrt(dh) into Q here
    k_ref[...] = (jnp.dot(xn, wk_ref[...], preferred_element_type=F32)
                  + bk_ref[...]).astype(k_ref.dtype)
    v_ref[...] = (jnp.dot(xn, wv_ref[...], preferred_element_type=F32)
                  + bv_ref[...]).astype(v_ref.dtype)


def ln_qkv(x2d, nw, nb, wq, bq, wk, bk, wv, bv, q_scale, row_tile=256):
    N, D = x2d.shape
    Dq = wq.shape[1]
    TM = _tile(N, row_tile)
    nw2, nb2 = nw.reshape(1, D), nb.reshape(1, D)
    bq2, bk2, bv2 = bq.reshape(1, -1), bk.reshape(1, -1), bv.reshape(1, -1)
    row_in = pl.BlockSpec((TM, D), lambda i: (i, 0))
    row_out = pl.BlockSpec((TM, Dq), lambda i: (i, 0))
    return pl.pallas_call(
        functools.partial(_ln_qkv_kernel, eps=LN_EPS, q_scale=q_scale),
        out_shape=tuple(jax.ShapeDtypeStruct((N, Dq), x2d.dtype) for _ in range(3)),
        grid=(N // TM,),
        in_specs=[row_in, _full_spec(nw2), _full_spec(nb2),
                  _full_spec(wq), _full_spec(bq2),
                  _full_spec(wk), _full_spec(bk2),
                  _full_spec(wv), _full_spec(bv2)],
        out_specs=(row_out, row_out, row_out),
        compiler_params=_PARALLEL_1D,
    )(x2d, nw2, nb2, wq, bq2, wk, bk2, wv, bv2)


# -------------------------------------------- LayerNorm + Linear (cross-Q) --
def _ln_linear_kernel(x_ref, nw_ref, nb_ref, w_ref, b_ref, o_ref, *, eps, scale):
    x = x_ref[...].astype(F32)
    mu = jnp.mean(x, axis=-1, keepdims=True)
    var = jnp.mean(jnp.square(x - mu), axis=-1, keepdims=True)
    xn = (x - mu) * jax.lax.rsqrt(var + eps) * nw_ref[...] + nb_ref[...]
    y = (jnp.dot(xn, w_ref[...], preferred_element_type=F32) + b_ref[...]) * scale
    o_ref[...] = y.astype(o_ref.dtype)


def ln_linear(x2d, nw, nb, w, b, scale=1.0, row_tile=256):
    N, D = x2d.shape
    Dout = w.shape[1]
    TM = _tile(N, row_tile)
    nw2, nb2, b2 = nw.reshape(1, D), nb.reshape(1, D), b.reshape(1, Dout)
    return pl.pallas_call(
        functools.partial(_ln_linear_kernel, eps=LN_EPS, scale=scale),
        out_shape=jax.ShapeDtypeStruct((N, Dout), x2d.dtype),
        grid=(N // TM,),
        in_specs=[pl.BlockSpec((TM, D), lambda i: (i, 0)),
                  _full_spec(nw2), _full_spec(nb2), _full_spec(w), _full_spec(b2)],
        out_specs=pl.BlockSpec((TM, Dout), lambda i: (i, 0)),
        compiler_params=_PARALLEL_1D,
    )(x2d, nw2, nb2, w, b2)


# ------------------------------- cross-attn memory K/V projection (fused) ---
def _memkv_kernel(m_ref, p_ref, wk_ref, bk_ref, wv_ref, bv_ref, k_ref, v_ref):
    mem = m_ref[...].astype(F32)
    kin = mem + p_ref[...].astype(F32)     # pos_enc_at_cross_attn_keys=True
    k_ref[...] = (jnp.dot(kin, wk_ref[...], preferred_element_type=F32)
                  + bk_ref[...]).astype(k_ref.dtype)
    v_ref[...] = (jnp.dot(mem, wv_ref[...], preferred_element_type=F32)
                  + bv_ref[...]).astype(v_ref.dtype)


def mem_kv(mem2d, pos2d, wk, bk, wv, bv, row_tile=512):
    N, D = mem2d.shape
    Dout = wk.shape[1]
    TM = _tile(N, row_tile)
    bk2, bv2 = bk.reshape(1, Dout), bv.reshape(1, Dout)
    row_in = pl.BlockSpec((TM, D), lambda i: (i, 0))
    row_out = pl.BlockSpec((TM, Dout), lambda i: (i, 0))
    return pl.pallas_call(
        _memkv_kernel,
        out_shape=(jax.ShapeDtypeStruct((N, Dout), mem2d.dtype),
                   jax.ShapeDtypeStruct((N, Dout), mem2d.dtype)),
        grid=(N // TM,),
        in_specs=[row_in, row_in, _full_spec(wk), _full_spec(bk2),
                  _full_spec(wv), _full_spec(bv2)],
        out_specs=(row_out, row_out),
        compiler_params=_PARALLEL_1D,
    )(mem2d, pos2d, wk, bk2, wv, bv2)


# --------------------------------- output projection + residual add (fused) --
def _proj_res_kernel(x_ref, w_ref, b_ref, res_ref, o_ref):
    y = jnp.dot(x_ref[...], w_ref[...], preferred_element_type=F32) + b_ref[...]
    o_ref[...] = (y + res_ref[...].astype(F32)).astype(o_ref.dtype)


def proj_residual(x2d, w, b, res2d, row_tile=256):
    N, Din = x2d.shape
    Dout = w.shape[1]
    TM = _tile(N, row_tile)
    b2 = b.reshape(1, Dout)
    return pl.pallas_call(
        _proj_res_kernel,
        out_shape=jax.ShapeDtypeStruct((N, Dout), res2d.dtype),
        grid=(N // TM,),
        in_specs=[pl.BlockSpec((TM, Din), lambda i: (i, 0)),
                  _full_spec(w), _full_spec(b2),
                  pl.BlockSpec((TM, Dout), lambda i: (i, 0))],
        out_specs=pl.BlockSpec((TM, Dout), lambda i: (i, 0)),
        compiler_params=_PARALLEL_1D,
    )(x2d, w, b2, res2d)


# ----------------------------- LayerNorm + MLP + residual add (fully fused) --
def _ln_mlp_res_kernel(x_ref, nw_ref, nb_ref, w1_ref, b1_ref, w2_ref, b2_ref,
                       o_ref, *, eps):
    x = x_ref[...].astype(F32)
    mu = jnp.mean(x, axis=-1, keepdims=True)
    var = jnp.mean(jnp.square(x - mu), axis=-1, keepdims=True)
    xn = (x - mu) * jax.lax.rsqrt(var + eps) * nw_ref[...] + nb_ref[...]
    h = jnp.maximum(jnp.dot(xn, w1_ref[...], preferred_element_type=F32)
                    + b1_ref[...], 0.0)                      # relu
    y = jnp.dot(h, w2_ref[...], preferred_element_type=F32) + b2_ref[...]
    o_ref[...] = (x + y).astype(o_ref.dtype)                 # residual on pre-LN input


def ln_mlp_residual(x2d, nw, nb, w1, b1, w2, b2, row_tile=256):
    N, D = x2d.shape
    TM = _tile(N, row_tile)
    nw2, nb2 = nw.reshape(1, D), nb.reshape(1, D)
    b1r, b2r = b1.reshape(1, -1), b2.reshape(1, -1)
    return pl.pallas_call(
        functools.partial(_ln_mlp_res_kernel, eps=LN_EPS),
        out_shape=jax.ShapeDtypeStruct((N, D), x2d.dtype),
        grid=(N // TM,),
        in_specs=[pl.BlockSpec((TM, D), lambda i: (i, 0)),
                  _full_spec(nw2), _full_spec(nb2),
                  _full_spec(w1), _full_spec(b1r),
                  _full_spec(w2), _full_spec(b2r)],
        out_specs=pl.BlockSpec((TM, D), lambda i: (i, 0)),
        compiler_params=_PARALLEL_1D,
    )(x2d, nw2, nb2, w1, b1r, w2, b2r)


# ------------------------------------------------------- final LayerNorm ----
def _ln_kernel(x_ref, w_ref, b_ref, o_ref, *, eps):
    x = x_ref[...].astype(F32)
    mu = jnp.mean(x, axis=-1, keepdims=True)
    var = jnp.mean(jnp.square(x - mu), axis=-1, keepdims=True)
    y = (x - mu) * jax.lax.rsqrt(var + eps)
    o_ref[...] = (y * w_ref[...] + b_ref[...]).astype(o_ref.dtype)


def layernorm(x2d, w, b, row_tile=512):
    N, D = x2d.shape
    TM = _tile(N, row_tile)
    w2, b2 = w.reshape(1, D), b.reshape(1, D)
    return pl.pallas_call(
        functools.partial(_ln_kernel, eps=LN_EPS),
        out_shape=jax.ShapeDtypeStruct((N, D), x2d.dtype),
        grid=(N // TM,),
        in_specs=[pl.BlockSpec((TM, D), lambda i: (i, 0)),
                  _full_spec(w2), _full_spec(b2)],
        out_specs=pl.BlockSpec((TM, D), lambda i: (i, 0)),
        compiler_params=_PARALLEL_1D,
    )(x2d, w2, b2)


# ------------------------------------- flash-style online-softmax attention --
def _flash_kernel(q_ref, k_ref, v_ref, o_ref, m_ref, l_ref, acc_ref):
    ki = pl.program_id(2)

    @pl.when(ki == 0)
    def _():
        m_ref[...] = jnp.full_like(m_ref, -jnp.inf)
        l_ref[...] = jnp.zeros_like(l_ref)
        acc_ref[...] = jnp.zeros_like(acc_ref)

    q = q_ref[0].astype(F32)          # (TQ, dh) -- already scaled by 1/sqrt(dh)
    k = k_ref[0].astype(F32)          # (TK, dh)
    v = v_ref[0].astype(F32)          # (TK, dh)

    s = jax.lax.dot_general(q, k, (((1,), (1,)), ((), ())),
                            preferred_element_type=F32)      # (TQ, TK)
    m_prev = m_ref[...]
    m_new = jnp.maximum(m_prev, jnp.max(s, axis=-1, keepdims=True))
    alpha = jnp.exp(m_prev - m_new)
    p = jnp.exp(s - m_new)
    l_ref[...] = alpha * l_ref[...] + jnp.sum(p, axis=-1, keepdims=True)
    acc_ref[...] = alpha * acc_ref[...] + jnp.dot(p, v, preferred_element_type=F32)
    m_ref[...] = m_new

    @pl.when(ki == pl.num_programs(2) - 1)
    def _():
        o_ref[0] = (acc_ref[...] * pl.reciprocal(l_ref[...], approx=True)
                    ).astype(o_ref.dtype)


def flash_sdpa(q, k, v, q_tile=256, k_tile=512):
    """q: (BH, Lq, dh) pre-scaled; k, v: (BH, Lk, dh)."""
    BH, Lq, dh = q.shape
    Lk = k.shape[1]
    TQ = _tile(Lq, q_tile)
    TK = _tile(Lk, k_tile)
    return pl.pallas_call(
        _flash_kernel,
        out_shape=jax.ShapeDtypeStruct((BH, Lq, dh), q.dtype),
        grid=(BH, Lq // TQ, Lk // TK),
        in_specs=[
            pl.BlockSpec((1, TQ, dh), lambda b, qi, ki: (b, qi, 0)),
            pl.BlockSpec((1, TK, dh), lambda b, qi, ki: (b, ki, 0)),
            pl.BlockSpec((1, TK, dh), lambda b, qi, ki: (b, ki, 0)),
        ],
        out_specs=pl.BlockSpec((1, TQ, dh), lambda b, qi, ki: (b, qi, 0)),
        scratch_shapes=[pltpu.VMEM((TQ, 1), F32),
                        pltpu.VMEM((TQ, 1), F32),
                        pltpu.VMEM((TQ, dh), F32)],
        compiler_params=pltpu.CompilerParams(
            dimension_semantics=("parallel", "parallel", "arbitrary")),
    )(q, k, v)


# ------------------------------------------------------- module-level glue --
def _split_heads(x2d, B, L, H, dh):
    # (B*L, H*dh) -> (B*H, L, dh). For real SAM2 num_heads==1 so this is a
    # reshape only (no data movement).
    return x2d.reshape(B, L, H, dh).transpose(0, 2, 1, 3).reshape(B * H, L, dh)


def _merge_heads(x, B, L, H, dh):
    return x.reshape(B, H, L, dh).transpose(0, 2, 1, 3).reshape(B * L, H * dh)


def memory_attention_layer(tgt, memory, mem_pos, p, num_heads):
    """SAM2 MemoryAttentionLayer forward (eval mode, dropout = identity)."""
    B, Lq, D = tgt.shape
    Lm = memory.shape[1]
    N = B * Lq
    tgt2d = tgt.reshape(N, D)

    # ---- self-attention: LN + QKV -> flash SDPA -> out-proj + residual -----
    sa = p["self_attn"]
    Dint = sa["wq"].shape[1]
    dh = Dint // num_heads
    scale = 1.0 / math.sqrt(dh)
    q, k, v = ln_qkv(tgt2d, p["norm1_w"], p["norm1_b"],
                     sa["wq"], sa["bq"], sa["wk"], sa["bk"], sa["wv"], sa["bv"],
                     q_scale=scale)
    o = flash_sdpa(_split_heads(q, B, Lq, num_heads, dh),
                   _split_heads(k, B, Lq, num_heads, dh),
                   _split_heads(v, B, Lq, num_heads, dh))
    o = _merge_heads(o, B, Lq, num_heads, dh)
    tgt2d = proj_residual(o, sa["wo"], sa["bo"], tgt2d)

    # ---- cross-attention to memory (keys get +pos, queries do not) ---------
    ca = p["cross_attn"]
    Dint_c = ca["wq"].shape[1]
    dh_c = Dint_c // num_heads
    scale_c = 1.0 / math.sqrt(dh_c)
    q = ln_linear(tgt2d, p["norm2_w"], p["norm2_b"], ca["wq"], ca["bq"],
                  scale=scale_c)
    k, v = mem_kv(memory.reshape(B * Lm, -1), mem_pos.reshape(B * Lm, -1),
                  ca["wk"], ca["bk"], ca["wv"], ca["bv"])
    o = flash_sdpa(_split_heads(q, B, Lq, num_heads, dh_c),
                   _split_heads(k, B, Lm, num_heads, dh_c),
                   _split_heads(v, B, Lm, num_heads, dh_c))
    o = _merge_heads(o, B, Lq, num_heads, dh_c)
    tgt2d = proj_residual(o, ca["wo"], ca["bo"], tgt2d)

    # ---- MLP: LN + Linear/ReLU/Linear + residual, fully fused --------------
    tgt2d = ln_mlp_residual(tgt2d, p["norm3_w"], p["norm3_b"],
                            p["w1"], p["b1"], p["w2"], p["b2"])
    return tgt2d.reshape(B, Lq, D)


def memory_attention_forward(curr, memory, curr_pos, memory_pos, params,
                             num_obj_ptr_tokens=0, num_heads=2,
                             pos_enc_at_input=True, batch_first=True):
    # num_obj_ptr_tokens == 0: the unflatten/flatten round-trips leave memory
    # unchanged and memory_exclude is empty (the only supported path here).
    assert num_obj_ptr_tokens == 0
    assert batch_first
    assert curr.shape[1] == memory.shape[1]

    output = curr
    if pos_enc_at_input and curr_pos is not None:
        output = output + 0.1 * curr_pos

    # convert to batch-first: (L, B, D) -> (B, L, D)
    output = jnp.transpose(output, (1, 0, 2))
    mem = jnp.transpose(memory, (1, 0, 2))
    mpos = jnp.transpose(memory_pos, (1, 0, 2))

    for lp in params["layers"]:
        output = memory_attention_layer(output, mem, mpos, lp, num_heads)

    B, Lq, D = output.shape
    normed = layernorm(output.reshape(B * Lq, D),
                       params["norm_w"], params["norm_b"]).reshape(B, Lq, D)
    return jnp.transpose(normed, (1, 0, 2))  # back to (Lq, B, D)


# ------------------------------------------------------ deterministic params --
def init_params(key, d_model, kv_dim, dim_ff, num_layers):
    def lin(k, din, dout):
        kw, kb = jax.random.split(k)
        w = jax.random.normal(kw, (din, dout), F32) * 0.05
        b = jax.random.normal(kb, (dout,), F32) * 0.01
        return w, b

    layers = []
    for lkey in jax.random.split(key, num_layers):
        ks = jax.random.split(lkey, 10)
        wq, bq = lin(ks[0], d_model, d_model)
        wk, bk = lin(ks[1], d_model, d_model)
        wv, bv = lin(ks[2], d_model, d_model)
        wo, bo = lin(ks[3], d_model, d_model)
        cwq, cbq = lin(ks[4], d_model, d_model)
        cwk, cbk = lin(ks[5], kv_dim, d_model)   # cross-attn k_proj: kv_in_dim -> d_model
        cwv, cbv = lin(ks[6], kv_dim, d_model)
        cwo, cbo = lin(ks[7], d_model, d_model)
        w1, b1 = lin(ks[8], d_model, dim_ff)
        w2, b2 = lin(ks[9], dim_ff, d_model)
        layers.append(dict(
            norm1_w=jnp.ones((d_model,), F32), norm1_b=jnp.zeros((d_model,), F32),
            norm2_w=jnp.ones((d_model,), F32), norm2_b=jnp.zeros((d_model,), F32),
            norm3_w=jnp.ones((d_model,), F32), norm3_b=jnp.zeros((d_model,), F32),
            self_attn=dict(wq=wq, bq=bq, wk=wk, bk=bk, wv=wv, bv=bv, wo=wo, bo=bo),
            cross_attn=dict(wq=cwq, bq=cbq, wk=cwk, bk=cbk, wv=cwv, bv=cbv, wo=cwo, bo=cbo),
            w1=w1, b1=b1, w2=w2, b2=b2,
        ))
    return dict(layers=layers,
                norm_w=jnp.ones((d_model,), F32),
                norm_b=jnp.zeros((d_model,), F32))


if __name__ == "__main__":
    d_model, kv_dim, num_heads, dim_ff, num_layers = 64, 64, 2, 128, 2
    B, Lq, Lm = 2, 16, 32

    key = jax.random.PRNGKey(0)
    k1, k2, k3, k4, kp = jax.random.split(key, 5)
    curr = jax.random.normal(k1, (Lq, B, d_model), F32)
    curr_pos = jax.random.normal(k2, (Lq, B, d_model), F32)
    memory = jax.random.normal(k3, (Lm, B, kv_dim), F32)
    memory_pos = jax.random.normal(k4, (Lm, B, kv_dim), F32)
    params = init_params(kp, d_model, kv_dim, dim_ff, num_layers)

    out = memory_attention_forward(curr, memory, curr_pos, memory_pos, params,
                                   num_obj_ptr_tokens=0, num_heads=num_heads)
    out = jax.block_until_ready(out)
    assert out.shape == (Lq, B, d_model)
    assert bool(jnp.all(jnp.isfinite(out)))
    print("KERNEL_OK")
</pallas_src>

<mosaic_0001>
module attributes {stable_mosaic.version = 11 : i64} {
  func.func @_ln_qkv_kernel(%arg0: i32, %arg1: memref<32x64xf32, #tpu.memory_space<vmem>>, %arg2: memref<1x64xf32, #tpu.memory_space<vmem>>, %arg3: memref<1x64xf32, #tpu.memory_space<vmem>>, %arg4: memref<64x64xf32, #tpu.memory_space<vmem>>, %arg5: memref<1x64xf32, #tpu.memory_space<vmem>>, %arg6: memref<64x64xf32, #tpu.memory_space<vmem>>, %arg7: memref<1x64xf32, #tpu.memory_space<vmem>>, %arg8: memref<64x64xf32, #tpu.memory_space<vmem>>, %arg9: memref<1x64xf32, #tpu.memory_space<vmem>>, %arg10: memref<32x64xf32, #tpu.memory_space<vmem>>, %arg11: memref<32x64xf32, #tpu.memory_space<vmem>>, %arg12: memref<32x64xf32, #tpu.memory_space<vmem>>) attributes {dimension_semantics = [#tpu.dimension_semantics<parallel>], iteration_bounds = array<i64: 1>, scalar_prefetch = 0 : i64, scratch_operands = 0 : i64, tpu.core_type = #tpu.core_type<tc>, window_params = [{transform_indices = @transform_0, window_bounds = array<i64: 32, 64>}, {pipeline_mode = #tpu.pipeline_mode<synchronous>, transform_indices = @transform_1, window_bounds = array<i64: 1, 64>}, {pipeline_mode = #tpu.pipeline_mode<synchronous>, transform_indices = @transform_2, window_bounds = array<i64: 1, 64>}, {pipeline_mode = #tpu.pipeline_mode<synchronous>, transform_indices = @transform_3, window_bounds = array<i64: 64, 64>}, {pipeline_mode = #tpu.pipeline_mode<synchronous>, transform_indices = @transform_4, window_bounds = array<i64: 1, 64>}, {pipeline_mode = #tpu.pipeline_mode<synchronous>, transform_indices = @transform_5, window_bounds = array<i64: 64, 64>}, {pipeline_mode = #tpu.pipeline_mode<synchronous>, transform_indices = @transform_6, window_bounds = array<i64: 1, 64>}, {pipeline_mode = #tpu.pipeline_mode<synchronous>, transform_indices = @transform_7, window_bounds = array<i64: 64, 64>}, {pipeline_mode = #tpu.pipeline_mode<synchronous>, transform_indices = @transform_8, window_bounds = array<i64: 1, 64>}, {transform_indices = @transform_9, window_bounds = array<i64: 32, 64>}, {transform_indices = @transform_10, window_bounds = array<i64: 32, 64>}, {transform_indices = @transform_11, window_bounds = array<i64: 32, 64>}]} {
    %c0 = arith.constant 0 : index
    %c0_0 = arith.constant 0 : index
    %0 = vector.load %arg1[%c0, %c0_0] : memref<32x64xf32, #tpu.memory_space<vmem>>, vector<32x64xf32>
    %cst = arith.constant dense<0.000000e+00> : vector<32xf32>
    %1 = vector.multi_reduction <add>, %0, %cst [1] : vector<32x64xf32> to vector<32xf32>
    %2 = vector.shape_cast %1 : vector<32xf32> to vector<32x1xf32>
    %cst_1 = arith.constant 6.400000e+01 : f32
    %3 = vector.broadcast %cst_1 : f32 to vector<32x1xf32>
    %4 = arith.divf %2, %3 : vector<32x1xf32>
    %5 = vector.broadcast %4 : vector<32x1xf32> to vector<32x64xf32>
    %6 = arith.subf %0, %5 : vector<32x64xf32>
    %7 = arith.mulf %6, %6 : vector<32x64xf32>
    %cst_2 = arith.constant dense<0.000000e+00> : vector<32xf32>
    %8 = vector.multi_reduction <add>, %7, %cst_2 [1] : vector<32x64xf32> to vector<32xf32>
    %9 = vector.shape_cast %8 : vector<32xf32> to vector<32x1xf32>
    %cst_3 = arith.constant 6.400000e+01 : f32
    %10 = vector.broadcast %cst_3 : f32 to vector<32x1xf32>
    %11 = arith.divf %9, %10 : vector<32x1xf32>
    %12 = vector.broadcast %4 : vector<32x1xf32> to vector<32x64xf32>
    %13 = arith.subf %0, %12 : vector<32x64xf32>
    %cst_4 = arith.constant 9.99999974E-6 : f32
    %14 = vector.broadcast %cst_4 : f32 to vector<32x1xf32>
    %15 = arith.addf %11, %14 : vector<32x1xf32>
    %16 = math.rsqrt %15 : vector<32x1xf32>
    %17 = vector.broadcast %16 : vector<32x1xf32> to vector<32x64xf32>
    %18 = arith.mulf %13, %17 : vector<32x64xf32>
    %c0_5 = arith.constant 0 : index
    %c0_6 = arith.constant 0 : index
    %19 = vector.load %arg2[%c0_5, %c0_6] : memref<1x64xf32, #tpu.memory_space<vmem>>, vector<1x64xf32>
    %20 = vector.broadcast %19 : vector<1x64xf32> to vector<32x64xf32>
    %21 = arith.mulf %18, %20 : vector<32x64xf32>
    %c0_7 = arith.constant 0 : index
    %c0_8 = arith.constant 0 : index
    %22 = vector.load %arg3[%c0_7, %c0_8] : memref<1x64xf32, #tpu.memory_space<vmem>>, vector<1x64xf32>
    %23 = vector.broadcast %22 : vector<1x64xf32> to vector<32x64xf32>
    %24 = arith.addf %21, %23 : vector<32x64xf32>
    %c0_9 = arith.constant 0 : index
    %c0_10 = arith.constant 0 : index
    %25 = vector.load %arg4[%c0_9, %c0_10] : memref<64x64xf32, #tpu.memory_space<vmem>>, vector<64x64xf32>
    %cst_11 = arith.constant dense<0.000000e+00> : vector<32x64xf32>
    %26 = tpu.matmul %24, %25, %cst_11 {dimension_numbers = #tpu.dot_dimension_numbers<[1], [0], [0], [1], [0, 0, 1, 1], [], []>} : vector<32x64xf32>, vector<64x64xf32>, vector<32x64xf32> -> vector<32x64xf32>
    %c0_12 = arith.constant 0 : index
    %c0_13 = arith.constant 0 : index
    %27 = vector.load %arg5[%c0_12, %c0_13] : memref<1x64xf32, #tpu.memory_space<vmem>>, vector<1x64xf32>
    %28 = vector.broadcast %27 : vector<1x64xf32> to vector<32x64xf32>
    %29 = arith.addf %26, %28 : vector<32x64xf32>
    %cst_14 = arith.constant 0.176776692 : f32
    %30 = vector.broadcast %cst_14 : f32 to vector<32x64xf32>
    %31 = arith.mulf %29, %30 : vector<32x64xf32>
    %c0_15 = arith.constant 0 : index
    %c0_16 = arith.constant 0 : index
    %32 = vector.load %arg10[%c0_15, %c0_16] : memref<32x64xf32, #tpu.memory_space<vmem>>, vector<32x64xf32>
    tpu.vector_store %arg10[%c0_15, %c0_16], %31 {strides = array<i32>} : memref<32x64xf32, #tpu.memory_space<vmem>>, vector<32x64xf32>,
    %c0_17 = arith.constant 0 : index
    %c0_18 = arith.constant 0 : index
    %33 = vector.load %arg6[%c0_17, %c0_18] : memref<64x64xf32, #tpu.memory_space<vmem>>, vector<64x64xf32>
    %cst_19 = arith.constant dense<0.000000e+00> : vector<32x64xf32>
    %34 = tpu.matmul %24, %33, %cst_19 {dimension_numbers = #tpu.dot_dimension_numbers<[1], [0], [0], [1], [0, 0, 1, 1], [], []>} : vector<32x64xf32>, vector<64x64xf32>, vector<32x64xf32> -> vector<32x64xf32>
    %c0_20 = arith.constant 0 : index
    %c0_21 = arith.constant 0 : index
    %35 = vector.load %arg7[%c0_20, %c0_21] : memref<1x64xf32, #tpu.memory_space<vmem>>, vector<1x64xf32>
    %36 = vector.broadcast %35 : vector<1x64xf32> to vector<32x64xf32>
    %37 = arith.addf %34, %36 : vector<32x64xf32>
    %c0_22 = arith.constant 0 : index
    %c0_23 = arith.constant 0 : index
    %38 = vector.load %arg11[%c0_22, %c0_23] : memref<32x64xf32, #tpu.memory_space<vmem>>, vector<32x64xf32>
    tpu.vector_store %arg11[%c0_22, %c0_23], %37 {strides = array<i32>} : memref<32x64xf32, #tpu.memory_space<vmem>>, vector<32x64xf32>,
    %c0_24 = arith.constant 0 : index
    %c0_25 = arith.constant 0 : index
    %39 = vector.load %arg8[%c0_24, %c0_25] : memref<64x64xf32, #tpu.memory_space<vmem>>, vector<64x64xf32>
    %cst_26 = arith.constant dense<0.000000e+00> : vector<32x64xf32>
    %40 = tpu.matmul %24, %39, %cst_26 {dimension_numbers = #tpu.dot_dimension_numbers<[1], [0], [0], [1], [0, 0, 1, 1], [], []>} : vector<32x64xf32>, vector<64x64xf32>, vector<32x64xf32> -> vector<32x64xf32>
    %c0_27 = arith.constant 0 : index
    %c0_28 = arith.constant 0 : index
    %41 = vector.load %arg9[%c0_27, %c0_28] : memref<1x64xf32, #tpu.memory_space<vmem>>, vector<1x64xf32>
    %42 = vector.broadcast %41 : vector<1x64xf32> to vector<32x64xf32>
    %43 = arith.addf %40, %42 : vector<32x64xf32>
    %c0_29 = arith.constant 0 : index
    %c0_30 = arith.constant 0 : index
    %44 = vector.load %arg12[%c0_29, %c0_30] : memref<32x64xf32, #tpu.memory_space<vmem>>, vector<32x64xf32>
    tpu.vector_store %arg12[%c0_29, %c0_30], %43 {strides = array<i32>} : memref<32x64xf32, #tpu.memory_space<vmem>>, vector<32x64xf32>,
    return
  }
  func.func @transform_0(%arg0: i32) -> (i32, i32) {
    %c0_i32 = arith.constant 0 : i32
    %c0_i32_0 = arith.constant 0 : i32
    return %arg0, %c0_i32 : i32, i32
  }
  func.func @transform_1(%arg0: i32) -> (i32, i32) {
    %c0_i32 = arith.constant 0 : i32
    %c0_i32_0 = arith.constant 0 : i32
    %c0_i32_1 = arith.constant 0 : i32
    return %c0_i32, %c0_i32_0 : i32, i32
  }
  func.func @transform_2(%arg0: i32) -> (i32, i32) {
    %c0_i32 = arith.constant 0 : i32
    %c0_i32_0 = arith.constant 0 : i32
    %c0_i32_1 = arith.constant 0 : i32
    return %c0_i32, %c0_i32_0 : i32, i32
  }
  func.func @transform_3(%arg0: i32) -> (i32, i32) {
    %c0_i32 = arith.constant 0 : i32
    %c0_i32_0 = arith.constant 0 : i32
    %c0_i32_1 = arith.constant 0 : i32
    return %c0_i32, %c0_i32_0 : i32, i32
  }
  func.func @transform_4(%arg0: i32) -> (i32, i32) {
    %c0_i32 = arith.constant 0 : i32
    %c0_i32_0 = arith.constant 0 : i32
    %c0_i32_1 = arith.constant 0 : i32
    return %c0_i32, %c0_i32_0 : i32, i32
  }
  func.func @transform_5(%arg0: i32) -> (i32, i32) {
    %c0_i32 = arith.constant 0 : i32
    %c0_i32_0 = arith.constant 0 : i32
    %c0_i32_1 = arith.constant 0 : i32
    return %c0_i32, %c0_i32_0 : i32, i32
  }
  func.func @transform_6(%arg0: i32) -> (i32, i32) {
    %c0_i32 = arith.constant 0 : i32
    %c0_i32_0 = arith.constant 0 : i32
    %c0_i32_1 = arith.constant 0 : i32
    return %c0_i32, %c0_i32_0 : i32, i32
  }
  func.func @transform_7(%arg0: i32) -> (i32, i32) {
    %c0_i32 = arith.constant 0 : i32
    %c0_i32_0 = arith.constant 0 : i32
    %c0_i32_1 = arith.constant 0 : i32
    return %c0_i32, %c0_i32_0 : i32, i32
  }
  func.func @transform_8(%arg0: i32) -> (i32, i32) {
    %c0_i32 = arith.constant 0 : i32
    %c0_i32_0 = arith.constant 0 : i32
    %c0_i32_1 = arith.constant 0 : i32
    return %c0_i32, %c0_i32_0 : i32, i32
  }
  func.func @transform_9(%arg0: i32) -> (i32, i32) {
    %c0_i32 = arith.constant 0 : i32
    %c0_i32_0 = arith.constant 0 : i32
    return %arg0, %c0_i32 : i32, i32
  }
  func.func @transform_10(%arg0: i32) -> (i32, i32) {
    %c0_i32 = arith.constant 0 : i32
    %c0_i32_0 = arith.constant 0 : i32
    return %arg0, %c0_i32 : i32, i32
  }
  func.func @transform_11(%arg0: i32) -> (i32, i32) {
    %c0_i32 = arith.constant 0 : i32
    %c0_i32_0 = arith.constant 0 : i32
    return %arg0, %c0_i32 : i32, i32
  }
}

</mosaic_0001>

<llo_original>
// kernel: tpu_custom_call.1
$region0: #{tpu_custom_call.1}
  #allocation0 [shape = 'u32[]', space=smem, size = 0x4, offset = 0x4, fixed_abs, tag = 'smem constant byte address 0x4 - core index']
  #allocation1 [shape = 'u32[144,128]{1,0:T(1,128)}', space=vmem, size = 0x12000, scoped, tag = 'internal scratch']
  %s0 = inlined_call_operand.hbm [shape: f32[32,64], index: 0, kind: input, shape index: {}]
  %s1 = inlined_call_operand.vmem [shape: f32[1,64], index: 1, kind: input, shape index: {}]
  %s2 = inlined_call_operand.vmem [shape: f32[1,64], index: 2, kind: input, shape index: {}]
  %s3 = inlined_call_operand.hbm [shape: f32[64,64], index: 3, kind: input, shape index: {}]
  %s4 = inlined_call_operand.vmem [shape: f32[1,64], index: 4, kind: input, shape index: {}]
  %s5 = inlined_call_operand.hbm [shape: f32[64,64], index: 5, kind: input, shape index: {}]
  %s6 = inlined_call_operand.vmem [shape: f32[1,64], index: 6, kind: input, shape index: {}]
  %s7 = inlined_call_operand.hbm [shape: f32[64,64], index: 7, kind: input, shape index: {}]
  %s8 = inlined_call_operand.vmem [shape: f32[1,64], index: 8, kind: input, shape index: {}]
  %s9 = inlined_call_operand.hbm [shape: f32[32,64], index: 9, kind: output, shape index: {0}]
  %s10 = inlined_call_operand.hbm [shape: f32[32,64], index: 10, kind: output, shape index: {1}]
  %s11 = inlined_call_operand.hbm [shape: f32[32,64], index: 11, kind: output, shape index: {2}]
  %12 = xla_tuple %s9, %s10, %s11
  %s13 = sld [smem:[#allocation0]]
  $region78: #{tpu_custom_call.1} parent=0
    _
  %s15 = ssub.s32 1, %s13
  %s16 = scalar_select 0, %s15, %s13
  $region1: #{tpu_custom_call.1} parent=0
    #allocation2 [shape = 'u8[16384]{0}', space=vmem, size = 0x4000, scoped, tag = 'input window, operand 0, single buffered']
    #allocation3 [shape = 's32[1]{0}', space=sflag, size = 0x4, scoped, tag = 'scoped memory for tpu_custom_call.1']
    #allocation4 [shape = 's32[1]{0}', space=sflag, size = 0x4, scoped, tag = 'scoped memory for tpu_custom_call.1']
    #allocation5 [shape = 'u8[32768]{0}', space=vmem, size = 0x8000, scoped, tag = 'input window, operand 3, single buffered']
    #allocation6 [shape = 's32[1]{0}', space=sflag, size = 0x4, scoped, tag = 'scoped memory for tpu_custom_call.1']
    #allocation7 [shape = 'u8[32768]{0}', space=vmem, size = 0x8000, scoped, tag = 'input window, operand 5, single buffered']
    #allocation8 [shape = 'u8[32768]{0}', space=vmem, size = 0x8000, scoped, tag = 'input window, operand 7, single buffered']
    #allocation9 [shape = 's32[1]{0}', space=sflag, size = 0x4, scoped, tag = 'scoped memory for tpu_custom_call.1']
    #allocation10 [shape = 'u8[16384]{0}', space=vmem, size = 0x4000, scoped, tag = 'output window, operand 0, single buffered']
    #allocation11 [shape = 'u8[16384]{0}', space=vmem, size = 0x4000, scoped, tag = 'output window, operand 1, single buffered']
    #allocation12 [shape = 's32[1]{0}', space=sflag, size = 0x4, scoped, tag = 'scoped memory for tpu_custom_call.1']
    #allocation13 [shape = 'u8[16384]{0}', space=vmem, size = 0x4000, scoped, tag = 'output window, operand 2, single buffered']
    %17 = vsyncpa [#allocation3], 0
    %18 = vsyncpa [#allocation6], 0
    %19 = vsyncpa [#allocation9], 0
    %20 = vsyncpa [#allocation4], 0
    %21 = vsyncpa [#allocation12], 0
    // Predicated region
    $region2: #{tpu_custom_call.1} parent=1 // pred_check
      _
    $region3: #{tpu_custom_call.1} parent=1 // pred_check_branch
      %23 = sbr.rel (0) target = $region5
    $region4: #{tpu_custom_call.1} parent=1 // pred_region
      %s25 = ssub.s32 512, 512
      %26 = vsyncadd [#allocation3], %s25
      %s27 = sshll.u32 [#allocation2], 4
      %s28 = int_to_ptr.vmem [resolvable:$true] %s27
      %33 = dma.hbm_to_vmem [thread:$0]  %s0, 512, %s28, [#allocation3], 128, 128, 8
    $region5: #{tpu_custom_call.1} parent=1 // pred_fallthru
      _
    // Predicated region
    $region6: #{tpu_custom_call.1} parent=1 // pred_check
      _
    $region7: #{tpu_custom_call.1} parent=1 // pred_check_branch
      %35 = sbr.rel (0) target = $region9
    $region8: #{tpu_custom_call.1} parent=1 // pred_region
      _
    $region9: #{tpu_custom_call.1} parent=1 // pred_fallthru
      _
    // Predicated region
    $region10: #{tpu_custom_call.1} parent=1 // pred_check
      _
    $region11: #{tpu_custom_call.1} parent=1 // pred_check_branch
      %37 = sbr.rel (0) target = $region13
    $region12: #{tpu_custom_call.1} parent=1 // pred_region
      _
    $region13: #{tpu_custom_call.1} parent=1 // pred_fallthru
      _
    // Predicated region
    $region14: #{tpu_custom_call.1} parent=1 // pred_check
      _
    $region15: #{tpu_custom_call.1} parent=1 // pred_check_branch
      %39 = sbr.rel (0) target = $region17
    $region16: #{tpu_custom_call.1} parent=1 // pred_region
      %s41 = ssub.s32 1024, 1024
      %42 = vsyncadd [#allocation6], %s41
      %s43 = sshll.u32 [#allocation5], 4
      %s44 = int_to_ptr.vmem [resolvable:$true] %s43
      %49 = dma.hbm_to_vmem [thread:$0]  %s3, 1024, %s44, [#allocation6], 128, 128, 8
    $region17: #{tpu_custom_call.1} parent=1 // pred_fallthru
      _
    // Predicated region
    $region18: #{tpu_custom_call.1} parent=1 // pred_check
      _
    $region19: #{tpu_custom_call.1} parent=1 // pred_check_branch
      %51 = sbr.rel (0) target = $region21
    $region20: #{tpu_custom_call.1} parent=1 // pred_region
      _
    $region21: #{tpu_custom_call.1} parent=1 // pred_fallthru
      _
    // Predicated region
    $region22: #{tpu_custom_call.1} parent=1 // pred_check
      _
    $region23: #{tpu_custom_call.1} parent=1 // pred_check_branch
      %53 = sbr.rel (0) target = $region25
    $region24: #{tpu_custom_call.1} parent=1 // pred_region
      %s55 = ssub.s32 1024, 1024
      %56 = vsyncadd [#allocation6], %s55
      %s57 = sshll.u32 [#allocation7], 4
      %s58 = int_to_ptr.vmem [resolvable:$true] %s57
      %63 = dma.hbm_to_vmem [thread:$0]  %s5, 1024, %s58, [#allocation6], 128, 128, 8
    $region25: #{tpu_custom_call.1} parent=1 // pred_fallthru
      _
    // Predicated region
    $region26: #{tpu_custom_call.1} parent=1 // pred_check
      _
    $region27: #{tpu_custom_call.1} parent=1 // pred_check_branch
      %65 = sbr.rel (0) target = $region29
    $region28: #{tpu_custom_call.1} parent=1 // pred_region
      _
    $region29: #{tpu_custom_call.1} parent=1 // pred_fallthru
      _
    // Predicated region
    $region30: #{tpu_custom_call.1} parent=1 // pred_check
      _
    $region31: #{tpu_custom_call.1} parent=1 // pred_check_branch
      %67 = sbr.rel (0) target = $region33
    $region32: #{tpu_custom_call.1} parent=1 // pred_region
      %s69 = ssub.s32 1024, 1024
      %70 = vsyncadd [#allocation9], %s69
      %s71 = sshll.u32 [#allocation8], 4
      %s72 = int_to_ptr.vmem [resolvable:$true] %s71
      %77 = dma.hbm_to_vmem [thread:$0]  %s7, 1024, %s72, [#allocation9], 128, 128, 8
    $region33: #{tpu_custom_call.1} parent=1 // pred_fallthru
      _
    // Predicated region
    $region34: #{tpu_custom_call.1} parent=1 // pred_check
      _
    $region35: #{tpu_custom_call.1} parent=1 // pred_check_branch
      %79 = sbr.rel (0) target = $region37
    $region36: #{tpu_custom_call.1} parent=1 // pred_region
      _
    $region37: #{tpu_custom_call.1} parent=1 // pred_fallthru
      _
    // Predicated region
    $region38: #{tpu_custom_call.1} parent=1 // pred_check
      _
    $region39: #{tpu_custom_call.1} parent=1 // pred_check_branch
      %81 = sbr.rel (0) target = $region41
    $region40: #{tpu_custom_call.1} parent=1 // pred_region
      %82 = dma.done [#allocation3], 512
    $region41: #{tpu_custom_call.1} parent=1 // pred_fallthru
      _
    // Predicated region
    $region42: #{tpu_custom_call.1} parent=1 // pred_check
      _
    $region43: #{tpu_custom_call.1} parent=1 // pred_check_branch
      %84 = sbr.rel (0) target = $region45
    $region44: #{tpu_custom_call.1} parent=1 // pred_region
      %85 = dma.done [#allocation6], 1024
    $region45: #{tpu_custom_call.1} parent=1 // pred_fallthru
      _
    // Predicated region
    $region46: #{tpu_custom_call.1} parent=1 // pred_check
      _
    $region47: #{tpu_custom_call.1} parent=1 // pred_check_branch
      %87 = sbr.rel (0) target = $region49
    $region48: #{tpu_custom_call.1} parent=1 // pred_region
      %88 = dma.done [#allocation6], 1024
    $region49: #{tpu_custom_call.1} parent=1 // pred_fallthru
      _
    // Predicated region
    $region50: #{tpu_custom_call.1} parent=1 // pred_check
      _
    $region51: #{tpu_custom_call.1} parent=1 // pred_check_branch
      %90 = sbr.rel (0) target = $region53
    $region52: #{tpu_custom_call.1} parent=1 // pred_region
      %91 = dma.done [#allocation9], 1024
    $region53: #{tpu_custom_call.1} parent=1 // pred_fallthru
      _
    %v92 = vld [vmem:[#allocation2] sm:$0xff]
    %v93 = vld [vmem:[#allocation2 + $0x8] sm:$0xff]
    %v94 = vld [vmem:[#allocation2 + $0x10] sm:$0xff]
    %v95 = vld [vmem:[#allocation2 + $0x18] sm:$0xff]
    %vm96 = vcmask 523264
    %v97 = vsel %vm96, %v92, 0.0
    %98 = vadd.xlane.f32.xlu0 %v97
    %v99 = vpop.xlane.xlu0 %98
    %v100 = vsel %vm96, %v93, 0.0
    %101 = vadd.xlane.f32.xlu0 %v100
    %v102 = vpop.xlane.xlu0 %101
    %v103 = vsel %vm96, %v94, 0.0
    %104 = vadd.xlane.f32.xlu0 %v103
    %v105 = vpop.xlane.xlu0 %104
    %v106 = vsel %vm96, %v95, 0.0
    %107 = vadd.xlane.f32.xlu0 %v106
    %v108 = vpop.xlane.xlu0 %107
    %v109 = vrcp.pop 64.0
    %v110 = vmul.f32 %v99, %v109
    %v111 = vmul.f32 %v102, %v109
    %v112 = vmul.f32 %v105, %v109
    %v113 = vmul.f32 %v108, %v109
    %v114 = vsub.f32 %v92, %v110
    %v115 = vsub.f32 %v93, %v111
    %v116 = vsub.f32 %v94, %v112
    %v117 = vsub.f32 %v95, %v113
    %v118 = vmul.f32 %v114, %v114
    %v119 = vmul.f32 %v115, %v115
    %v120 = vmul.f32 %v116, %v116
    %v121 = vmul.f32 %v117, %v117
    %v122 = vsel %vm96, %v118, 0.0
    %123 = vadd.xlane.f32.xlu0 %v122
    %v124 = vpop.xlane.xlu0 %123
    %v125 = vsel %vm96, %v119, 0.0
    %126 = vadd.xlane.f32.xlu0 %v125
    %v127 = vpop.xlane.xlu0 %126
    %v128 = vsel %vm96, %v120, 0.0
    %129 = vadd.xlane.f32.xlu0 %v128
    %v130 = vpop.xlane.xlu0 %129
    %v131 = vsel %vm96, %v121, 0.0
    %132 = vadd.xlane.f32.xlu0 %v131
    %v133 = vpop.xlane.xlu0 %132
    %v134 = vmul.f32 %v124, %v109
    %v135 = vmul.f32 %v127, %v109
    %v136 = vmul.f32 %v130, %v109
    %v137 = vmul.f32 %v133, %v109
    %v138 = vadd.f32 %v134, 1e-05
    %v139 = vadd.f32 %v135, 1e-05
    %v140 = vadd.f32 %v136, 1e-05
    %v141 = vadd.f32 %v137, 1e-05
    %v142 = vrsqrt.pop %v138
    %v143 = vrsqrt.pop %v139
    %v144 = vrsqrt.pop %v140
    %v145 = vrsqrt.pop %v141
    %v146 = vmul.f32 %v114, %v142
    %v147 = vmul.f32 %v115, %v143
    %v148 = vmul.f32 %v116, %v144
    %v149 = vmul.f32 %v117, %v145
    %v150 = vld [vmem:[%s1] sm:$0x1]
    %v152 = vlaneseq
    %v153 = vshrl.u32 %v152, 7
    %v154 = vsub.s32 0, %v153
    %v155 = vrot.slane %v150, %v154
    %v157 = vmul.f32 %v146, %v155
    %v158 = vmul.f32 %v147, %v155
    %v159 = vmul.f32 %v148, %v155
    %v160 = vmul.f32 %v149, %v155
    %v161 = vld [vmem:[%s2] sm:$0x1]
    %v163 = vlaneseq
    %v164 = vshrl.u32 %v163, 7
    %v165 = vsub.s32 0, %v164
    %v166 = vrot.slane %v161, %v165
    %v168 = vadd.f32 %v157, %v166
    %v169 = vadd.f32 %v158, %v166
    %v170 = vadd.f32 %v159, %v166
    %v171 = vadd.f32 %v160, %v166
    %v172 = vld [vmem:[#allocation5] sm:$0xff]
    %v173 = vld [vmem:[#allocation5 + $0x8] sm:$0xff]
    %v174 = vld [vmem:[#allocation5 + $0x10] sm:$0xff]
    %v175 = vld [vmem:[#allocation5 + $0x18] sm:$0xff]
    %v176 = vld [vmem:[#allocation5 + $0x20] sm:$0xff]
    %v177 = vld [vmem:[#allocation5 + $0x28] sm:$0xff]
    %v178 = vld [vmem:[#allocation5 + $0x30] sm:$0xff]
    %v179 = vld [vmem:[#allocation5 + $0x38] sm:$0xff]
    %v180 = vld [vmem:[%s4] sm:$0x1]
    %v182 = vlaneseq
    %v183 = vshrl.u32 %v182, 7
    %v184 = vsub.s32 0, %v183
    %v185 = vrot.slane %v180, %v184
    %v188 = vsel %vm96, %v168, 0
    %v191 = vsel %vm96, %v169, 0
    %v194 = vsel %vm96, %v170, 0
    %v197 = vsel %vm96, %v171, 0
    %199 = vmatprep.subr.mxu0 0.0
    %200 = vmatpush1.msra.mxu0 %v172
    %201 = vmatprep.subr.mxu0 0.0
    %202 = vmatpush1.msra.mxu0 %v173
    %203 = vmatprep.subr.mxu0 0.0
    %204 = vmatpush1.msra.mxu0 %v174
    %205 = vmatprep.subr.mxu0 0.0
    %206 = vmatpush1.msra.mxu0 %v175
    %207 = vmatprep.subr.mxu0 0.0
    %208 = vmatpush1.msra.mxu0 %v176
    %209 = vmatprep.subr.mxu0 0.0
    %210 = vmatpush1.msra.mxu0 %v177
    %211 = vmatprep.subr.mxu0 0.0
    %212 = vmatpush1.msra.mxu0 %v178
    %213 = vmatprep.subr.mxu0 0.0
    %214 = vmatpush1.msra.mxu0 %v179
    %215 = vmatprep.subr.mxu0 0.0
    %216 = vmatpush1.msra.mxu0 0.0
    %217 = vmatprep.subr.mxu0 0.0
    %218 = vmatpush1.msra.mxu0 0.0
    %219 = vmatprep.subr.mxu0 0.0
    %220 = vmatpush1.msra.mxu0 0.0
    %221 = vmatprep.subr.mxu0 0.0
    %222 = vmatpush1.msra.mxu0 0.0
    %223 = vmatprep.subr.mxu0 0.0
    %224 = vmatpush1.msra.mxu0 0.0
    %225 = vmatprep.subr.mxu0 0.0
    %226 = vmatpush1.msra.mxu0 0.0
    %227 = vmatprep.subr.mxu0 0.0
    %228 = vmatpush1.msra.mxu0 0.0
    %229 = vmatprep.subr.mxu0 0.0
    %230 = vmatpush1.msra.mxu0 0.0
    %231 = vmatprep.subr.mxu0 0.0
    %232 = vmatpush1.msra.mxu0 0.0
    %233 = vmatprep.subr.mxu0 0.0
    %234 = vmatpush1.msra.mxu0 0.0
    %235 = vmatprep.subr.mxu0 0.0
    %236 = vmatpush1.msra.mxu0 0.0
    %237 = vmatprep.subr.mxu0 0.0
    %238 = vmatpush1.msra.mxu0 0.0
    %239 = vmatprep.subr.mxu0 0.0
    %240 = vmatpush1.msra.mxu0 0.0
    %241 = vmatprep.subr.mxu0 0.0
    %242 = vmatpush1.msra.mxu0 0.0
    %243 = vmatprep.subr.mxu0 0.0
    %244 = vmatpush1.msra.mxu0 0.0
    %245 = vmatprep.subr.mxu0 0.0
    %246 = vmatpush1.msra.mxu0 0.0
    %247 = vmatprep.subr.mxu0 0.0
    %248 = vmatpush1.msra.mxu0 0.0
    %249 = vmatprep.subr.mxu0 0.0
    %250 = vmatpush1.msra.mxu0 0.0
    %251 = vmatprep.subr.mxu0 0.0
    %252 = vmatpush1.msra.mxu0 0.0
    %253 = vmatprep.subr.mxu0 0.0
    %254 = vmatpush1.msra.mxu0 0.0
    %255 = vmatprep.subr.mxu0 0.0
    %256 = vmatpush1.msra.mxu0 0.0
    %257 = vmatprep.subr.mxu0 0.0
    %258 = vmatpush1.msra.mxu0 0.0
    %259 = vmatprep.subr.mxu0 0.0
    %260 = vmatpush1.msra.mxu0 0.0
    %261 = vmatprep.subr.mxu0 0.0
    %262 = vmatpush1.msra.mxu0 0.0
    %263 = vmatprep.mubr.f32.mxu0 0.0
    %264 = vmatmul.mubr.f32.gmra.mrb[0].mxu0 %v188
    %v265 = vpop.f32.mrb[0].mxu0
    %v266 = vadd.f32 %v185, %v265
    %v267 = vpop.f32.mrb[0].mxu0
    %268 = vmatprep.mubr.f32.mxu0 0.0
    %269 = vmatmul.mubr.f32.gmra.mrb[0].mxu0 %v191
    %v270 = vpop.f32.mrb[0].mxu0
    %v271 = vadd.f32 %v185, %v270
    %v272 = vpop.f32.mrb[0].mxu0
    %273 = vmatprep.mubr.f32.mxu0 0.0
    %274 = vmatmul.mubr.f32.gmra.mrb[0].mxu0 %v194
    %v275 = vpop.f32.mrb[0].mxu0
    %v276 = vadd.f32 %v185, %v275
    %v277 = vpop.f32.mrb[0].mxu0
    %278 = vmatprep.mubr.f32.mxu0 0.0
    %279 = vmatmul.mubr.f32.gmra.mrb[0].mxu0 %v197
    %v280 = vpop.f32.mrb[0].mxu0
    %v281 = vadd.f32 %v185, %v280
    %v282 = vpop.f32.mrb[0].mxu0
    %283 = vdwg.mxu0
    %v284 = vmul.f32 %v266, 0.17677669
    %v285 = vmul.f32 %v271, 0.17677669
    %v286 = vmul.f32 %v276, 0.17677669
    %v287 = vmul.f32 %v281, 0.17677669
    %288 = vst.msk [vmem:[#allocation10] sm:$0xff] %vm96, %v284
    %289 = vst.msk [vmem:[#allocation10 + $0x8] sm:$0xff] %vm96, %v285
    %290 = vst.msk [vmem:[#allocation10 + $0x10] sm:$0xff] %vm96, %v286
    %291 = vst.msk [vmem:[#allocation10 + $0x18] sm:$0xff] %vm96, %v287
    %v292 = vld [vmem:[#allocation7] sm:$0xff]
    %v293 = vld [vmem:[#allocation7 + $0x8] sm:$0xff]
    %v294 = vld [vmem:[#allocation7 + $0x10] sm:$0xff]
    %v295 = vld [vmem:[#allocation7 + $0x18] sm:$0xff]
    %v296 = vld [vmem:[#allocation7 + $0x20] sm:$0xff]
    %v297 = vld [vmem:[#allocation7 + $0x28] sm:$0xff]
    %v298 = vld [vmem:[#allocation7 + $0x30] sm:$0xff]
    %v299 = vld [vmem:[#allocation7 + $0x38] sm:$0xff]
    %v300 = vld [vmem:[%s6] sm:$0x1]
    %v302 = vlaneseq
    %v303 = vshrl.u32 %v302, 7
    %v304 = vsub.s32 0, %v303
    %v305 = vrot.slane %v300, %v304
    %307 = vmatprep.subr.mxu0 0.0
    %308 = vmatpush1.msra.mxu0 %v292
    %309 = vmatprep.subr.mxu0 0.0
    %310 = vmatpush1.msra.mxu0 %v293
    %311 = vmatprep.subr.mxu0 0.0
    %312 = vmatpush1.msra.mxu0 %v294
    %313 = vmatprep.subr.mxu0 0.0
    %314 = vmatpush1.msra.mxu0 %v295
    %315 = vmatprep.subr.mxu0 0.0
    %316 = vmatpush1.msra.mxu0 %v296
    %317 = vmatprep.subr.mxu0 0.0
    %318 = vmatpush1.msra.mxu0 %v297
    %319 = vmatprep.subr.mxu0 0.0
    %320 = vmatpush1.msra.mxu0 %v298
    %321 = vmatprep.subr.mxu0 0.0
    %322 = vmatpush1.msra.mxu0 %v299
    %323 = vmatprep.subr.mxu0 0.0
    %324 = vmatpush1.msra.mxu0 0.0
    %325 = vmatprep.subr.mxu0 0.0
    %326 = vmatpush1.msra.mxu0 0.0
    %327 = vmatprep.subr.mxu0 0.0
    %328 = vmatpush1.msra.mxu0 0.0
    %329 = vmatprep.subr.mxu0 0.0
    %330 = vmatpush1.msra.mxu0 0.0
    %331 = vmatprep.subr.mxu0 0.0
    %332 = vmatpush1.msra.mxu0 0.0
    %333 = vmatprep.subr.mxu0 0.0
    %334 = vmatpush1.msra.mxu0 0.0
    %335 = vmatprep.subr.mxu0 0.0
    %336 = vmatpush1.msra.mxu0 0.0
    %337 = vmatprep.subr.mxu0 0.0
    %338 = vmatpush1.msra.mxu0 0.0
    %339 = vmatprep.subr.mxu0 0.0
    %340 = vmatpush1.msra.mxu0 0.0
    %341 = vmatprep.subr.mxu0 0.0
    %342 = vmatpush1.msra.mxu0 0.0
    %343 = vmatprep.subr.mxu0 0.0
    %344 = vmatpush1.msra.mxu0 0.0
    %345 = vmatprep.subr.mxu0 0.0
    %346 = vmatpush1.msra.mxu0 0.0
    %347 = vmatprep.subr.mxu0 0.0
    %348 = vmatpush1.msra.mxu0 0.0
    %349 = vmatprep.subr.mxu0 0.0
    %350 = vmatpush1.msra.mxu0 0.0
    %351 = vmatprep.subr.mxu0 0.0
    %352 = vmatpush1.msra.mxu0 0.0
    %353 = vmatprep.subr.mxu0 0.0
    %354 = vmatpush1.msra.mxu0 0.0
    %355 = vmatprep.subr.mxu0 0.0
    %356 = vmatpush1.msra.mxu0 0.0
    %357 = vmatprep.subr.mxu0 0.0
    %358 = vmatpush1.msra.mxu0 0.0
    %359 = vmatprep.subr.mxu0 0.0
    %360 = vmatpush1.msra.mxu0 0.0
    %361 = vmatprep.subr.mxu0 0.0
    %362 = vmatpush1.msra.mxu0 0.0
    %363 = vmatprep.subr.mxu0 0.0
    %364 = vmatpush1.msra.mxu0 0.0
    %365 = vmatprep.subr.mxu0 0.0
    %366 = vmatpush1.msra.mxu0 0.0
    %367 = vmatprep.subr.mxu0 0.0
    %368 = vmatpush1.msra.mxu0 0.0
    %369 = vmatprep.subr.mxu0 0.0
    %370 = vmatpush1.msra.mxu0 0.0
    %371 = vmatprep.mubr.f32.mxu0 0.0
    %372 = vmatmul.mubr.f32.gmra.mrb[0].mxu0 %v188
    %v373 = vpop.f32.mrb[0].mxu0
    %v374 = vadd.f32 %v305, %v373
    %v375 = vpop.f32.mrb[0].mxu0
    %376 = vmatprep.mubr.f32.mxu0 0.0
    %377 = vmatmul.mubr.f32.gmra.mrb[0].mxu0 %v191
    %v378 = vpop.f32.mrb[0].mxu0
    %v379 = vadd.f32 %v305, %v378
    %v380 = vpop.f32.mrb[0].mxu0
    %381 = vmatprep.mubr.f32.mxu0 0.0
    %382 = vmatmul.mubr.f32.gmra.mrb[0].mxu0 %v194
    %v383 = vpop.f32.mrb[0].mxu0
    %v384 = vadd.f32 %v305, %v383
    %v385 = vpop.f32.mrb[0].mxu0
    %386 = vmatprep.mubr.f32.mxu0 0.0
    %387 = vmatmul.mubr.f32.gmra.mrb[0].mxu0 %v197
    %v388 = vpop.f32.mrb[0].mxu0
    %v389 = vadd.f32 %v305, %v388
    %v390 = vpop.f32.mrb[0].mxu0
    %391 = vdwg.mxu0
    %392 = vst.msk [vmem:[#allocation11] sm:$0xff] %vm96, %v374
    %393 = vst.msk [vmem:[#allocation11 + $0x8] sm:$0xff] %vm96, %v379
    %394 = vst.msk [vmem:[#allocation11 + $0x10] sm:$0xff] %vm96, %v384
    %395 = vst.msk [vmem:[#allocation11 + $0x18] sm:$0xff] %vm96, %v389
    %v396 = vld [vmem:[#allocation8] sm:$0xff]
    %v397 = vld [vmem:[#allocation8 + $0x8] sm:$0xff]
    %v398 = vld [vmem:[#allocation8 + $0x10] sm:$0xff]
    %v399 = vld [vmem:[#allocation8 + $0x18] sm:$0xff]
    %v400 = vld [vmem:[#allocation8 + $0x20] sm:$0xff]
    %v401 = vld [vmem:[#allocation8 + $0x28] sm:$0xff]
    %v402 = vld [vmem:[#allocation8 + $0x30] sm:$0xff]
    %v403 = vld [vmem:[#allocation8 + $0x38] sm:$0xff]
    %v404 = vld [vmem:[%s8] sm:$0x1]
    %v406 = vlaneseq
    %v407 = vshrl.u32 %v406, 7
    %v408 = vsub.s32 0, %v407
    %v409 = vrot.slane %v404, %v408
    %411 = vmatprep.subr.mxu0 0.0
    %412 = vmatpush1.msra.mxu0 %v396
    %413 = vmatprep.subr.mxu0 0.0
    %414 = vmatpush1.msra.mxu0 %v397
    %415 = vmatprep.subr.mxu0 0.0
    %416 = vmatpush1.msra.mxu0 %v398
    %417 = vmatprep.subr.mxu0 0.0
    %418 = vmatpush1.msra.mxu0 %v399
    %419 = vmatprep.subr.mxu0 0.0
    %420 = vmatpush1.msra.mxu0 %v400
    %421 = vmatprep.subr.mxu0 0.0
    %422 = vmatpush1.msra.mxu0 %v401
    %423 = vmatprep.subr.mxu0 0.0
    %424 = vmatpush1.msra.mxu0 %v402
    %425 = vmatprep.subr.mxu0 0.0
    %426 = vmatpush1.msra.mxu0 %v403
    %427 = vmatprep.subr.mxu0 0.0
    %428 = vmatpush1.msra.mxu0 0.0
    %429 = vmatprep.subr.mxu0 0.0
    %430 = vmatpush1.msra.mxu0 0.0
    %431 = vmatprep.subr.mxu0 0.0
    %432 = vmatpush1.msra.mxu0 0.0
    %433 = vmatprep.subr.mxu0 0.0
    %434 = vmatpush1.msra.mxu0 0.0
    %435 = vmatprep.subr.mxu0 0.0
    %436 = vmatpush1.msra.mxu0 0.0
    %437 = vmatprep.subr.mxu0 0.0
    %438 = vmatpush1.msra.mxu0 0.0
    %439 = vmatprep.subr.mxu0 0.0
    %440 = vmatpush1.msra.mxu0 0.0
    %441 = vmatprep.subr.mxu0 0.0
    %442 = vmatpush1.msra.mxu0 0.0
    %443 = vmatprep.subr.mxu0 0.0
    %444 = vmatpush1.msra.mxu0 0.0
    %445 = vmatprep.subr.mxu0 0.0
    %446 = vmatpush1.msra.mxu0 0.0
    %447 = vmatprep.subr.mxu0 0.0
    %448 = vmatpush1.msra.mxu0 0.0
    %449 = vmatprep.subr.mxu0 0.0
    %450 = vmatpush1.msra.mxu0 0.0
    %451 = vmatprep.subr.mxu0 0.0
    %452 = vmatpush1.msra.mxu0 0.0
    %453 = vmatprep.subr.mxu0 0.0
    %454 = vmatpush1.msra.mxu0 0.0
    %455 = vmatprep.subr.mxu0 0.0
    %456 = vmatpush1.msra.mxu0 0.0
    %457 = vmatprep.subr.mxu0 0.0
    %458 = vmatpush1.msra.mxu0 0.0
    %459 = vmatprep.subr.mxu0 0.0
    %460 = vmatpush1.msra.mxu0 0.0
    %461 = vmatprep.subr.mxu0 0.0
    %462 = vmatpush1.msra.mxu0 0.0
    %463 = vmatprep.subr.mxu0 0.0
    %464 = vmatpush1.msra.mxu0 0.0
    %465 = vmatprep.subr.mxu0 0.0
    %466 = vmatpush1.msra.mxu0 0.0
    %467 = vmatprep.subr.mxu0 0.0
    %468 = vmatpush1.msra.mxu0 0.0
    %469 = vmatprep.subr.mxu0 0.0
    %470 = vmatpush1.msra.mxu0 0.0
    %471 = vmatprep.subr.mxu0 0.0
    %472 = vmatpush1.msra.mxu0 0.0
    %473 = vmatprep.subr.mxu0 0.0
    %474 = vmatpush1.msra.mxu0 0.0
    %475 = vmatprep.mubr.f32.mxu0 0.0
    %476 = vmatmul.mubr.f32.gmra.mrb[0].mxu0 %v188
    %v477 = vpop.f32.mrb[0].mxu0
    %v478 = vadd.f32 %v409, %v477
    %v479 = vpop.f32.mrb[0].mxu0
    %480 = vmatprep.mubr.f32.mxu0 0.0
    %481 = vmatmul.mubr.f32.gmra.mrb[0].mxu0 %v191
    %v482 = vpop.f32.mrb[0].mxu0
    %v483 = vadd.f32 %v409, %v482
    %v484 = vpop.f32.mrb[0].mxu0
    %485 = vmatprep.mubr.f32.mxu0 0.0
    %486 = vmatmul.mubr.f32.gmra.mrb[0].mxu0 %v194
    %v487 = vpop.f32.mrb[0].mxu0
    %v488 = vadd.f32 %v409, %v487
    %v489 = vpop.f32.mrb[0].mxu0
    %490 = vmatprep.mubr.f32.mxu0 0.0
    %491 = vmatmul.mubr.f32.gmra.mrb[0].mxu0 %v197
    %v492 = vpop.f32.mrb[0].mxu0
    %v493 = vadd.f32 %v409, %v492
    %v494 = vpop.f32.mrb[0].mxu0
    %495 = vdwg.mxu0
    %496 = vst.msk [vmem:[#allocation13] sm:$0xff] %vm96, %v478
    %497 = vst.msk [vmem:[#allocation13 + $0x8] sm:$0xff] %vm96, %v483
    %498 = vst.msk [vmem:[#allocation13 + $0x10] sm:$0xff] %vm96, %v488
    %499 = vst.msk [vmem:[#allocation13 + $0x18] sm:$0xff] %vm96, %v493
    // Predicated region
    $region54: #{tpu_custom_call.1} parent=1 // pred_check
      _
    $region55: #{tpu_custom_call.1} parent=1 // pred_check_branch
      %501 = sbr.rel (0) target = $region57
    $region56: #{tpu_custom_call.1} parent=1 // pred_region
      %s503 = ssub.s32 512, 512
      %504 = vsyncadd [#allocation4], %s503
      %s505 = sshll.u32 [#allocation10], 4
      %s506 = int_to_ptr.vmem [resolvable:$true] %s505
      %511 = dma.vmem_to_hbm [thread:$0]  %s506, 512, %s9, [#allocation4], 128, 128, 8
    $region57: #{tpu_custom_call.1} parent=1 // pred_fallthru
      _
    // Predicated region
    $region58: #{tpu_custom_call.1} parent=1 // pred_check
      _
    $region59: #{tpu_custom_call.1} parent=1 // pred_check_branch
      %513 = sbr.rel (0) target = $region61
    $region60: #{tpu_custom_call.1} parent=1 // pred_region
      %s515 = ssub.s32 512, 512
      %516 = vsyncadd [#allocation12], %s515
      %s517 = sshll.u32 [#allocation11], 4
      %s518 = int_to_ptr.vmem [resolvable:$true] %s517
      %523 = dma.vmem_to_hbm [thread:$0]  %s518, 512, %s10, [#allocation12], 128, 128, 8
    $region61: #{tpu_custom_call.1} parent=1 // pred_fallthru
      _
    // Predicated region
    $region62: #{tpu_custom_call.1} parent=1 // pred_check
      _
    $region63: #{tpu_custom_call.1} parent=1 // pred_check_branch
      %525 = sbr.rel (0) target = $region65
    $region64: #{tpu_custom_call.1} parent=1 // pred_region
      %s527 = ssub.s32 512, 512
      %528 = vsyncadd [#allocation12], %s527
      %s529 = sshll.u32 [#allocation13], 4
      %s530 = int_to_ptr.vmem [resolvable:$true] %s529
      %535 = dma.vmem_to_hbm [thread:$0]  %s530, 512, %s11, [#allocation12], 128, 128, 8
    $region65: #{tpu_custom_call.1} parent=1 // pred_fallthru
      _
    // Predicated region
    $region66: #{tpu_custom_call.1} parent=1 // pred_check
      _
    $region67: #{tpu_custom_call.1} parent=1 // pred_check_branch
      %537 = sbr.rel (0) target = $region69
    $region68: #{tpu_custom_call.1} parent=1 // pred_region
      %538 = dma.done [#allocation4], 512
    $region69: #{tpu_custom_call.1} parent=1 // pred_fallthru
      _
    // Predicated region
    $region70: #{tpu_custom_call.1} parent=1 // pred_check
      _
    $region71: #{tpu_custom_call.1} parent=1 // pred_check_branch
      %540 = sbr.rel (0) target = $region73
    $region72: #{tpu_custom_call.1} parent=1 // pred_region
      %541 = dma.done [#allocation12], 512
    $region73: #{tpu_custom_call.1} parent=1 // pred_fallthru
      _
    // Predicated region
    $region74: #{tpu_custom_call.1} parent=1 // pred_check
      _
    $region75: #{tpu_custom_call.1} parent=1 // pred_check_branch
      %543 = sbr.rel (0) target = $region77
    $region76: #{tpu_custom_call.1} parent=1 // pred_region
      %544 = dma.done [#allocation12], 512
    $region77: #{tpu_custom_call.1} parent=1 // pred_fallthru
      _
    %545 = vsyncpa [#allocation3], 1
    %546 = vsyncpa [#allocation6], 1
    %547 = vsyncpa [#allocation9], 1
    %548 = vsyncpa [#allocation4], 1
    %549 = vsyncpa [#allocation12], 1

</llo_original>
